<compile_context>
chip_gen: v7x
topology: tpu7x:2x2x1
jax: 0.10.0
libtpu: 0.0.40
codegen_flags: <defaults>
</compile_context>

<pallas_src>
import functools
import math

import jax
import jax.numpy as jnp
from jax.experimental import pallas as pl
from jax.experimental.pallas import tpu as pltpu

_MIB = 1024 * 1024


def _round_up(x: int, m: int) -> int:
    return ((x + m - 1) // m) * m


def _sublane_align(dtype) -> int:
    """Native sublane tile height: 8 rows of 32-bit, packed for narrow dtypes."""
    itemsize = jnp.dtype(dtype).itemsize
    return 8 * max(1, 4 // itemsize)  # f32 -> 8, bf16 -> 16, int8/fp8 -> 32


def _physical_vmem_bytes() -> int:
    """Best-effort physical VMEM query; conservative (v7x, 64 MiB) fallback."""
    try:
        info = pltpu.get_tpu_info()
        for name in ("vmem_capacity_bytes", "vmem_bytes", "vmem_size_bytes"):
            v = getattr(info, name, None)
            if v:
                return int(v)
    except Exception:
        pass
    return 64 * _MIB


def _pool_kernel_strided(win: int, stride: int, rows_out: int):
    """Max over `win` rows spaced by `stride`, producing `rows_out` output rows."""

    def kernel(x_ref, o_ref):
        # x_ref: (1, in_rows, D_blk)   o_ref: (1, rows_out, D_blk)
        # Strided ref reads keep only `win` live slices (no full-tile load).
        acc = x_ref[:, pl.ds(0, rows_out, stride=stride), :]
        for w in range(1, win):
            acc = jnp.maximum(acc, x_ref[:, pl.ds(w, rows_out, stride=stride), :])
        o_ref[...] = acc

    return kernel


def _pool_kernel_lanes(win: int, d: int):
    """Max over `win` contiguous 128-aligned lane slices of width `d`."""

    def kernel(x_ref, o_ref):
        # x_ref: (1, t_out, win*d)   o_ref: (1, t_out, d)
        acc = x_ref[:, :, 0:d]
        for w in range(1, win):
            acc = jnp.maximum(acc, x_ref[:, :, w * d:(w + 1) * d])
        o_ref[...] = acc

    return kernel


def maxpool1d(x, win: int = 2, stride=None, pad: int = 0, *,
              _t_rows=None, _small_bytes=2 * _MIB):
    """x: (B, L, D) -> (B, out_len, D); max over windows along L (torch MaxPool1d)."""
    if stride is None:
        stride = win
    assert pad == 0, "padding>0 not used by this module's defaults"
    # TODO(synk): pad > 0 would need dtype-min (-inf) padding, not zeros.

    B, L, D = x.shape
    itemsize = jnp.dtype(x.dtype).itemsize
    align = _sublane_align(x.dtype)
    out_len = (L - win) // stride + 1
    assert out_len >= 1

    phys_vmem = _physical_vmem_bytes()
    # ~8 MiB input tiles on 128 MiB-VMEM parts (v5e/v6e), ~4 MiB on 64 MiB (v7x).
    target_in_bytes = 8 * _MIB if phys_vmem >= 100 * _MIB else 4 * _MIB
    vmem_cap = min(64 * _MIB, int(phys_vmem * 0.75))

    tiny = B * L * D * itemsize <= _small_bytes
    tiled = (stride == win) and (out_len >= align) and not tiny
    lane_path = tiled and (L % win == 0) and (D % 128 == 0)

    cost = pl.CostEstimate(
        flops=B * out_len * D * max(win - 1, 1),
        transcendentals=0,
        bytes_accessed=(B * L * D + B * out_len * D) * itemsize,
    )
    out_shape = jax.ShapeDtypeStruct((B, out_len, D), x.dtype)

    def _lane_candidates():
        return [D] + [c for c in (512, 256, 128) if c < D and D % c == 0]

    def _pick_t_out(row_in_bytes, grid_d):
        if _t_rows is not None:
            assert _t_rows % align == 0, (_t_rows, align)
            return min(_t_rows, _round_up(out_len, align))
        t = max(align, (target_in_bytes // max(1, row_in_bytes)) // align * align)
        t = min(t, _round_up(out_len, align))
        # v7x shards the "parallel" axes over 2 TensorCores: keep >= ~4 grid
        # steps when the problem allows it so neither core sits idle.
        while B * grid_d * pl.cdiv(out_len, t) < 4 and t > align:
            t = max(align, (t // 2) // align * align)
        return t

    if lane_path:
        # Contiguous fast path: row-major (B, L, D) == (B, out_len, win*D), so
        # the reshape is free; each window is `win` contiguous lane slices.
        x_in = x.reshape(B, out_len, win * D)
        t_out = _pick_t_out(win * D * itemsize, 1)
        grid = (B, pl.cdiv(out_len, t_out))
        in_block, out_block = (1, t_out, win * D), (1, t_out, D)
        in_specs = [pl.BlockSpec(in_block, lambda b, ti: (b, ti, 0))]
        out_specs = pl.BlockSpec(out_block, lambda b, ti: (b, ti, 0))
        kernel = _pool_kernel_lanes(win, D)
        sem = ("parallel", "parallel")
    elif tiled:
        # Non-overlapping windows with strided sublane reads; prefer full-D
        # lane blocks (contiguous DMAs) unless the minimum tile would not fit.
        if D % 128 == 0:
            cands = _lane_candidates()
            D_blk = next((c for c in cands
                          if align * win * c * itemsize <= 2 * target_in_bytes),
                         cands[-1])
        else:
            D_blk = D  # non-128-multiple lane dims must equal the full array dim
        grid_d = D // D_blk
        t_out = _pick_t_out(win * D_blk * itemsize, grid_d)
        x_in = x
        grid = (B, pl.cdiv(out_len, t_out), grid_d)
        in_block, out_block = (1, t_out * win, D_blk), (1, t_out, D_blk)
        in_specs = [pl.BlockSpec(in_block, lambda b, ti, di: (b, ti, di))]
        out_specs = pl.BlockSpec(out_block, lambda b, ti, di: (b, ti, di))
        kernel = _pool_kernel_strided(win, win, t_out)
        sem = ("parallel", "parallel", "parallel")
    else:
        # Fallback (tiny inputs, overlapping windows, or out_len < align):
        # whole L per (batch, lane-block) step; full-dim blocks are always
        # (8,128)-legal. Bound VMEM by shrinking the lane block when possible.
        if D % 128 == 0:
            cands = _lane_candidates()
            D_blk = next((c for c in cands if L * c * itemsize <= 2 * target_in_bytes),
                         cands[-1])
        else:
            D_blk = D
        # TODO(synk): for very long sequences with overlapping windows even a
        # 128-lane whole-L block can exceed VMEM; that case needs a halo-tiled
        # manual-DMA pipeline (pl.ANY input + pltpu.make_async_copy).
        grid_d = D // D_blk
        x_in = x
        grid = (B, 1, grid_d)
        in_block, out_block = (1, L, D_blk), (1, out_len, D_blk)
        in_specs = [pl.BlockSpec(in_block, lambda b, ti, di: (b, 0, di))]
        out_specs = pl.BlockSpec(out_block, lambda b, ti, di: (b, 0, di))
        kernel = _pool_kernel_strided(win, stride, out_len)
        sem = ("parallel", "parallel", "parallel")

    # Double-buffered in+out footprint drives the VMEM limit; never below the
    # 32 MiB needed to beat v5e's 16 MiB scoped default, never near physical.
    footprint = 2 * (math.prod(in_block) + math.prod(out_block)) * itemsize
    vmem_limit = int(min(vmem_cap, max(32 * _MIB, footprint + 4 * _MIB)))

    return pl.pallas_call(
        kernel,
        out_shape=out_shape,
        grid_spec=pltpu.PrefetchScalarGridSpec(
            num_scalar_prefetch=0,
            grid=grid,
            in_specs=in_specs,
            out_specs=out_specs,
        ),
        compiler_params=pltpu.CompilerParams(
            dimension_semantics=sem,
            vmem_limit_bytes=vmem_limit,
        ),
        cost_estimate=cost,
    )(x_in)


def maxpool1d_ref(x, win: int = 2, stride=None, pad: int = 0):
    """Pure-JAX reference matching torch.nn.MaxPool1d on (B, L, D) input."""
    if stride is None:
        stride = win
    B, L, D = x.shape
    out_len = (L - win) // stride + 1
    cols = [x[:, w: w + stride * out_len: stride, :] for w in range(win)]
    return functools.reduce(jnp.maximum, cols)


if __name__ == "__main__":
    key = jax.random.PRNGKey(0)

    # 1) Module-implied small shape (batch=2, max_seq_len=16, dim=32): tiny path.
    B, L, D = 2, 16, 32
    x = jax.random.normal(key, (B, L, D), dtype=jnp.float32)
    out = jax.block_until_ready(maxpool1d(x, win=2, stride=None, pad=0))
    ref = maxpool1d_ref(x, win=2, stride=None, pad=0)
    assert out.shape == (B, L // 2, D), out.shape
    assert jnp.allclose(out, ref), "mismatch vs reference (default config)"

    # 2) Contiguous reshape fast path (stride==win, L%win==0, D%128==0), grid (B, 4).
    x2 = jax.random.normal(jax.random.PRNGKey(1), (2, 256, 384), dtype=jnp.float32)
    out2 = jax.block_until_ready(maxpool1d(x2, win=2, _small_bytes=0, _t_rows=32))
    ref2 = maxpool1d_ref(x2, win=2)
    assert out2.shape == ref2.shape
    assert jnp.allclose(out2, ref2), "mismatch vs reference (reshape path)"

    # 3) Strided tiled path (L % win != 0) with a padded last L tile.
    x3 = jax.random.normal(jax.random.PRNGKey(2), (2, 70, 128), dtype=jnp.float32)
    out3 = jax.block_until_ready(maxpool1d(x3, win=2, _small_bytes=0, _t_rows=24))
    ref3 = maxpool1d_ref(x3, win=2)
    assert out3.shape == ref3.shape
    assert jnp.allclose(out3, ref3), "mismatch vs reference (strided tiled path)"

    # 4) Overlapping-window fallback (stride != win).
    x4 = jax.random.normal(jax.random.PRNGKey(3), (2, 17, 32), dtype=jnp.float32)
    out4 = jax.block_until_ready(maxpool1d(x4, win=3, stride=2, _small_bytes=0))
    ref4 = maxpool1d_ref(x4, win=3, stride=2)
    assert out4.shape == ref4.shape
    assert jnp.allclose(out4, ref4), "mismatch vs reference (overlap config)"

    # 5) bf16: dtype-aware sublane alignment (16 rows) on the reshape path.
    x5 = jax.random.normal(jax.random.PRNGKey(4), (2, 256, 256)).astype(jnp.bfloat16)
    out5 = jax.block_until_ready(maxpool1d(x5, win=2, _small_bytes=0, _t_rows=32))
    ref5 = maxpool1d_ref(x5, win=2)
    assert out5.shape == ref5.shape
    assert jnp.allclose(out5.astype(jnp.float32), ref5.astype(jnp.float32)), \
        "mismatch vs reference (bf16 config)"

    print("KERNEL_OK")
</pallas_src>

<mosaic_0001>
module attributes {stable_mosaic.version = 11 : i64} {
  func.func @kernel(%arg0: i32, %arg1: i32, %arg2: i32, %arg3: memref<1x16x32xf32, #tpu.memory_space<vmem>>, %arg4: memref<1x8x32xf32, #tpu.memory_space<vmem>>) attributes {dimension_semantics = [#tpu.dimension_semantics<parallel>, #tpu.dimension_semantics<parallel>, #tpu.dimension_semantics<parallel>], iteration_bounds = array<i64: 2, 1, 1>, scalar_prefetch = 0 : i64, scratch_operands = 0 : i64, tpu.core_type = #tpu.core_type<tc>, window_params = [{transform_indices = @transform_0, window_bounds = array<i64: 1, 16, 32>}, {transform_indices = @transform_1, window_bounds = array<i64: 1, 8, 32>}]} {
    %c0 = arith.constant 0 : index
    %c0_0 = arith.constant 0 : index
    %c0_1 = arith.constant 0 : index
    %0 = tpu.strided_load %arg3[%c0, %c0_0, %c0_1] {strides = array<i32: 1, 2, 1>} : memref<1x16x32xf32, #tpu.memory_space<vmem>>, vector<1x8x32xf32>
    %c0_2 = arith.constant 0 : index
    %c1 = arith.constant 1 : index
    %c0_3 = arith.constant 0 : index
    %1 = tpu.strided_load %arg3[%c0_2, %c1, %c0_3] {strides = array<i32: 1, 2, 1>} : memref<1x16x32xf32, #tpu.memory_space<vmem>>, vector<1x8x32xf32>
    %2 = arith.maximumf %0, %1 : vector<1x8x32xf32>
    %c0_4 = arith.constant 0 : index
    %c0_5 = arith.constant 0 : index
    %c0_6 = arith.constant 0 : index
    %3 = vector.load %arg4[%c0_4, %c0_5, %c0_6] : memref<1x8x32xf32, #tpu.memory_space<vmem>>, vector<1x8x32xf32>
    tpu.vector_store %arg4[%c0_4, %c0_5, %c0_6], %2 {strides = array<i32>} : memref<1x8x32xf32, #tpu.memory_space<vmem>>, vector<1x8x32xf32>,
    return
  }
  func.func @transform_0(%arg0: i32, %arg1: i32, %arg2: i32) -> (i32, i32, i32) {
    %c0_i32 = arith.constant 0 : i32
    %c0_i32_0 = arith.constant 0 : i32
    return %arg0, %c0_i32, %arg2 : i32, i32, i32
  }
  func.func @transform_1(%arg0: i32, %arg1: i32, %arg2: i32) -> (i32, i32, i32) {
    %c0_i32 = arith.constant 0 : i32
    %c0_i32_0 = arith.constant 0 : i32
    return %arg0, %c0_i32, %arg2 : i32, i32, i32
  }
}

</mosaic_0001>

<llo_original>
// kernel: tpu_custom_call.1
$region0: #{tpu_custom_call.1}
  #allocation0 [shape = 'u32[]', space=smem, size = 0x4, offset = 0x4, fixed_abs, tag = 'smem constant byte address 0x4 - core index']
  #allocation1 [shape = 'u32[144,128]{1,0:T(1,128)}', space=vmem, size = 0x12000, scoped, tag = 'internal scratch']
  %s0 = inlined_call_operand.hbm [shape: f32[2,16,32], index: 0, kind: input, shape index: {}]
  %s1 = inlined_call_operand.hbm [shape: f32[2,8,32], index: 1, kind: output, shape index: {}]
  %s2 = sld [smem:[#allocation0]]
  $region41: #{tpu_custom_call.1} parent=0
    _
  %s4 = ssub.s32 1, %s2
  %s5 = scalar_select 0, %s4, %s2
  $region1: #{tpu_custom_call.1} parent=0
    #allocation2 [shape = 'u8[16384]{0}', space=vmem, size = 0x4000, scoped, tag = 'input window, operand 0']
    #allocation3 [shape = 's32[2]{0}', space=sflag, size = 0x8, scoped, tag = 'scoped memory for tpu_custom_call.1']
    #allocation4 [shape = 's32[2]{0}', space=sflag, size = 0x8, scoped, tag = 'scoped memory for tpu_custom_call.1']
    #allocation5 [shape = 'u8[8192]{0}', space=vmem, size = 0x2000, scoped, tag = 'output window, operand 0']
    %6 = vsyncpa [#allocation3], 0
    %s7 = scalar_lea.sflag [#allocation3], 1
    %8 = vsyncpa %s7, 0
    %9 = vsyncpa [#allocation4], 0
    %s10 = scalar_lea.sflag [#allocation4], 1
    %11 = vsyncpa %s10, 0
    loop: start=0, step=1, limit=4
    $region2: #{tpu_custom_call.1} parent=1 // loop_pre_header
      _
    $region3: #{tpu_custom_call.1} parent=1 // loop_header
      %s13 = sphi 0, %s17
      %p14 = scmp.ge.s32.totalorder %s13, 4
      %s20 = sphi 0, %s39
      %s21 = sphi 0, %s35
      %s22 = sphi 0, %s31
      %s23 = sphi 0, %s20
      %s24 = sphi 0, %s21
      %s25 = sphi 0, %s22
      %s26 = sphi 0, %s23
      %s27 = sphi 0, %s24
      %s28 = sphi 0, %s25
      %s44 = sphi 0, %s46
      %s47 = sphi 0, %s44
      %s48 = sphi 0, %s47
      %s64 = sphi 0, %s48
      %s72 = sphi 0, %s74
      %s75 = sphi 0, %s72
      %s76 = sphi 0, %s75
      %s92 = sphi 0, %s76
    $region4: #{tpu_custom_call.1} parent=1 // loop_header_branch
      %16 = sbr.rel (%p14) target = $region8
    $region5: #{tpu_custom_call.1} parent=1 // loop_body
      %s18 = ssub.s32 %s13, 1
      %s19 = ssub.s32 %s13, 2
      %s29 = sadd.s32 1, %s22
      %p30 = scmp.ge.s32.totalorder %s29, 1
      %s31 = scalar_select %p30, 0, %s29
      %s32 = sadd.s32 1, %s21
      %s33 = scalar_select %p30, %s32, %s21
      %p34 = scmp.ge.s32.totalorder %s33, 1
      %s35 = scalar_select %p34, 0, %s33
      %s36 = sadd.s32 1, %s20
      %s37 = scalar_select %p34, %s36, %s20
      %p38 = scmp.ge.s32.totalorder %s37, 2
      %s39 = scalar_select %p38, 0, %s37
      %s40 = ssub.s32 %s20, %s39
      %s41 = ssub.s32 %s22, %s31
      %s42 = sor.u32 %s40, %s41
      %p43 = scmp.eq.s32.totalorder %s42, 0
      %s45 = sadd.s32 %s44, 1
      %s46 = scalar_select %p43, %s44, %s45
      %p49 = pneg %p43
      %p50 = scmp.eq.s32.totalorder %s13, 1
      %p51 = por %p49, %p50
      %p52 = scmp.ne.s32.totalorder %s44, %s47
      %p53 = scmp.eq.s32.totalorder %s13, 0
      %p54 = por %p52, %p53
      %p55 = scmp.ne.s32.totalorder %s44, %s47
      %p56 = scmp.eq.s32.totalorder %s18, 1
      %p57 = por %p55, %p56
      %p58 = scmp.ne.s32.totalorder %s47, %s48
      %p59 = scmp.eq.s32.totalorder %s18, 0
      %p60 = por %p58, %p59
      %p61 = scmp.ne.s32.totalorder %s47, %s48
      %p62 = scmp.eq.s32.totalorder %s19, 1
      %p63 = por %p61, %p62
      %p65 = scmp.ne.s32.totalorder %s48, %s64
      %p66 = scmp.eq.s32.totalorder %s19, 0
      %p67 = por %p65, %p66
      %s68 = ssub.s32 %s20, %s39
      %s69 = ssub.s32 %s22, %s31
      %s70 = sor.u32 %s68, %s69
      %p71 = scmp.eq.s32.totalorder %s70, 0
      %s73 = sadd.s32 %s72, 1
      %s74 = scalar_select %p71, %s72, %s73
      %p77 = pneg %p71
      %p78 = scmp.eq.s32.totalorder %s13, 1
      %p79 = por %p77, %p78
      %p80 = scmp.ne.s32.totalorder %s72, %s75
      %p81 = scmp.eq.s32.totalorder %s13, 0
      %p82 = por %p80, %p81
      %p83 = scmp.ne.s32.totalorder %s72, %s75
      %p84 = scmp.eq.s32.totalorder %s18, 1
      %p85 = por %p83, %p84
      %p86 = scmp.ne.s32.totalorder %s75, %s76
      %p87 = scmp.eq.s32.totalorder %s18, 0
      %p88 = por %p86, %p87
      %p89 = scmp.ne.s32.totalorder %s75, %s76
      %p90 = scmp.eq.s32.totalorder %s19, 1
      %p91 = por %p89, %p90
      %p93 = scmp.ne.s32.totalorder %s76, %s92
      %p94 = scmp.eq.s32.totalorder %s19, 0
      %p95 = por %p93, %p94
      %p96 = scmp.le.s32.totalorder 1, %s13
      %p97 = scmp.lt.s32.totalorder %s13, 3
      %p98 = pnand %p96, %p97
      %p99 = pneg %p98
      // Predicated region
      $region9: #{tpu_custom_call.1} parent=5 // pred_check
        _
      $region10: #{tpu_custom_call.1} parent=5 // pred_check_branch
        %101 = sbr.rel (%p98) target = $region12
      $region11: #{tpu_custom_call.1} parent=5 // pred_region
        %s102 = ssub.s32 %s13, 1
      $region12: #{tpu_custom_call.1} parent=5 // pred_fallthru
        _
      %p103 = scmp.lt.s32.totalorder %s13, 2
      // Predicated region
      $region13: #{tpu_custom_call.1} parent=5 // pred_check
        %p104 = pneg %p103
      $region14: #{tpu_custom_call.1} parent=5 // pred_check_branch
        %106 = sbr.rel (%p104) target = $region16
      $region15: #{tpu_custom_call.1} parent=5 // pred_region
        // Predicated region
        $region17: #{tpu_custom_call.1} parent=15 // pred_check
          %p107 = pneg %p54
        $region18: #{tpu_custom_call.1} parent=15 // pred_check_branch
          %109 = sbr.rel (%p107) target = $region20
        $region19: #{tpu_custom_call.1} parent=15 // pred_region
          %s110 = sand.u32 %s44, 1
          %s111 = scalar_lea.sflag [#allocation3], %s110
          %s112 = sand.u32 %s44, 1
          %s113 = smul.addr %s112, 16
          %s114 = scalar_lea.vmem [#allocation2], %s113
          %s116 = ssub.s32 256, 256
          %117 = vsyncadd %s111, %s116
          %s118 = smul.addr %s20, 2
          %s119 = sadd.s32 %s22, %s118
          %s120 = smul.addr %s119, 128
          %s121 = scalar_lea.hbm %s0, %s120
          %s122 = sshll.u32 %s114, 4
          %s123 = int_to_ptr.vmem [resolvable:$true] %s122
          %128 = dma.hbm_to_vmem [thread:$0]  %s121, 256, %s123, %s111, 128, 128, 8
        $region20: #{tpu_custom_call.1} parent=15 // pred_fallthru
          _
      $region16: #{tpu_custom_call.1} parent=5 // pred_fallthru
        _
      %p129 = scmp.le.s32.totalorder 1, %s13
      %p130 = scmp.lt.s32.totalorder %s13, 3
      %p131 = pnand %p129, %p130
      %p132 = pneg %p131
      // Predicated region
      $region21: #{tpu_custom_call.1} parent=5 // pred_check
        _
      $region22: #{tpu_custom_call.1} parent=5 // pred_check_branch
        %134 = sbr.rel (%p131) target = $region24
      $region23: #{tpu_custom_call.1} parent=5 // pred_region
        %s135 = ssub.s32 %s13, 1
        %s136 = sand.u32 %s47, 1
        %s137 = scalar_lea.sflag [#allocation3], %s136
        %s138 = sand.u32 %s47, 1
        %s139 = smul.addr %s138, 16
        %s140 = scalar_lea.vmem [#allocation2], %s139
        // Predicated region
        $region25: #{tpu_custom_call.1} parent=23 // pred_check
          %p141 = pneg %p60
        $region26: #{tpu_custom_call.1} parent=23 // pred_check_branch
          %143 = sbr.rel (%p141) target = $region28
        $region27: #{tpu_custom_call.1} parent=23 // pred_region
          %144 = dma.done %s137, 256
        $region28: #{tpu_custom_call.1} parent=23 // pred_fallthru
          _
        %s145 = sand.u32 %s47, 1
        %s146 = scalar_lea.sflag [#allocation3], %s145
        %s147 = sand.u32 %s47, 1
        %s148 = smul.addr %s147, 16
        %s149 = scalar_lea.vmem [#allocation2], %s148
        %p150 = pneg %p60
        %p151 = pneg %p57
        %p152 = pneg %p88
        %p153 = pneg %p85
        %s154 = sand.u32 %s75, 1
        %s155 = scalar_lea.sflag [#allocation4], %s154
        %s156 = sand.u32 %s75, 1
        %s157 = smul.addr %s156, 8
        %s158 = scalar_lea.vmem [#allocation5], %s157
        %v159 = vld [vmem:[%s140] ss:$2 sm:$0xff]
        %s160 = scalar_lea.vmem %s140, 1 [#allocation2]
        %v161 = vld [vmem:[%s160] ss:$2 sm:$0xff]
        %v162 = vmax.f32 %v159, %v161
        %vm163 = vcmask 261120
        %164 = vst.msk [vmem:[%s158] sm:$0xff] %vm163, %v162
        %s165 = sand.u32 %s75, 1
        %s166 = scalar_lea.sflag [#allocation4], %s165
        %s167 = sand.u32 %s75, 1
        %s168 = smul.addr %s167, 8
        %s169 = scalar_lea.vmem [#allocation5], %s168
        // Predicated region
        $region29: #{tpu_custom_call.1} parent=23 // pred_check
          %p170 = pneg %p85
        $region30: #{tpu_custom_call.1} parent=23 // pred_check_branch
          %172 = sbr.rel (%p170) target = $region32
        $region31: #{tpu_custom_call.1} parent=23 // pred_region
          %s174 = ssub.s32 128, 128
          %175 = vsyncadd %s166, %s174
          %s176 = sadd.s32 %s25, %s23
          %s177 = smul.addr %s176, 128
          %s178 = scalar_lea.hbm %s1, %s177
          %s180 = sshll.u32 %s169, 4
          %s181 = int_to_ptr.vmem [resolvable:$true] %s180
          %183 = dma.vmem_to_hbm [thread:$0]  %s181, 128, %s178, %s166
        $region32: #{tpu_custom_call.1} parent=23 // pred_fallthru
          _
      $region24: #{tpu_custom_call.1} parent=5 // pred_fallthru
        _
      %p184 = scmp.le.s32.totalorder 2, %s13
      // Predicated region
      $region33: #{tpu_custom_call.1} parent=5 // pred_check
        %p185 = pneg %p184
      $region34: #{tpu_custom_call.1} parent=5 // pred_check_branch
        %187 = sbr.rel (%p185) target = $region36
      $region35: #{tpu_custom_call.1} parent=5 // pred_region
        %s188 = ssub.s32 %s13, 2
        // Predicated region
        $region37: #{tpu_custom_call.1} parent=35 // pred_check
          %p189 = pneg %p91
        $region38: #{tpu_custom_call.1} parent=35 // pred_check_branch
          %191 = sbr.rel (%p189) target = $region40
        $region39: #{tpu_custom_call.1} parent=35 // pred_region
          %s192 = sand.u32 %s76, 1
          %s193 = scalar_lea.sflag [#allocation4], %s192
          %s194 = sand.u32 %s76, 1
          %s195 = smul.addr %s194, 8
          %s196 = scalar_lea.vmem [#allocation5], %s195
          %197 = dma.done %s193, 128
        $region40: #{tpu_custom_call.1} parent=35 // pred_fallthru
          _
      $region36: #{tpu_custom_call.1} parent=5 // pred_fallthru
        _
    $region6: #{tpu_custom_call.1} parent=1 // loop_footer
      %s17 = sadd.s32 1, %s13
    $region7: #{tpu_custom_call.1} parent=1 // loop_footer_branch
      %12 = sbr.rel target = $region3
    $region8: #{tpu_custom_call.1} parent=1 // loop_exit
      _
    %198 = vsyncpa [#allocation3], 1
    %s199 = scalar_lea.sflag [#allocation3], 1
    %200 = vsyncpa %s199, 1
    %201 = vsyncpa [#allocation4], 1
    %s202 = scalar_lea.sflag [#allocation4], 1
    %203 = vsyncpa %s202, 1

</llo_original>
